<compile_context>
chip_gen: v6e
topology: v6e:2x2x1
jax: 0.10.0
libtpu: 0.0.40
codegen_flags: <defaults>
</compile_context>

<pallas_src>
import jax
import jax.numpy as jnp
from jax.experimental import pallas as pl
from jax.experimental.pallas import tpu as pltpu

EPS = 1e-5


def denselayer_kernel(x_ref, wt_ref, b_ref, gamma_ref, beta_ref, o_ref, acc_ref):
    """Grid = (C_out tiles, C_in tiles).  N is fully resident in the block."""
    k = pl.program_id(1)

    @pl.when(k == 0)
    def _init():
        acc_ref[...] = jnp.zeros_like(acc_ref)

    # Linear partial product: x(:, k-tile) @ W^T(k-tile, j-tile), f32 accumulate.
    acc_ref[...] += jnp.dot(x_ref[...], wt_ref[...],
                            preferred_element_type=jnp.float32)

    @pl.when(k == pl.num_programs(1) - 1)
    def _epilogue():
        # bias + ReLU
        h = acc_ref[...] + b_ref[...]          # (N, tn) + (1, tn)
        h = jnp.maximum(h, 0.0)

        # Fused one-pass BatchNorm1d (training mode, biased variance) over
        # the batch axis.  Per-feature stats -> fully local to this C_out tile.
        n = h.shape[0]
        inv_n = jnp.float32(1.0 / n)
        s = jnp.sum(h, axis=0, keepdims=True)          # (1, tn)
        ssq = jnp.sum(h * h, axis=0, keepdims=True)    # (1, tn)
        mean = s * inv_n
        var = jnp.maximum(ssq * inv_n - mean * mean, 0.0)
        inv_std = jax.lax.rsqrt(var + EPS)

        out = gamma_ref[...] * (h - mean) * inv_std + beta_ref[...]
        o_ref[...] = out.astype(o_ref.dtype)


def denselayer_forward(x, w, b, gamma, beta):
    """x: (N, C).  w: (C, C) PyTorch layout (out, in).  b/gamma/beta: (C,)."""
    n, c = x.shape
    assert w.shape == (c, c)

    # Lane-dense padding of the feature dims to a multiple of 128.  Zero
    # padding of C_in leaves the matmul unchanged; padded C_out columns are
    # computed independently (their BN stats are self-contained) and sliced
    # off at the end.
    cp = ((c + 127) // 128) * 128

    wt = w.T                                   # (C_in, C_out) so kernel does x @ wt
    if cp != c:
        x_p = jnp.zeros((n, cp), x.dtype).at[:, :c].set(x)
        wt_p = jnp.zeros((cp, cp), w.dtype).at[:c, :c].set(wt)
        b_p = jnp.zeros((cp,), b.dtype).at[:c].set(b)
        g_p = jnp.zeros((cp,), gamma.dtype).at[:c].set(gamma)
        be_p = jnp.zeros((cp,), beta.dtype).at[:c].set(beta)
    else:
        x_p, wt_p, b_p, g_p, be_p = x, wt, b, gamma, beta

    b2 = b_p.reshape(1, cp)
    g2 = g_p.reshape(1, cp)
    be2 = be_p.reshape(1, cp)

    # Lane-dense, 256-granular tiles when possible (matches v6e/v7x 256x256
    # MXU); 128-granular otherwise (fine on v5e's 128x128 MXU).
    tn = 256 if cp % 256 == 0 else 128
    tk = 256 if cp % 256 == 0 else 128
    grid = (cp // tn, cp // tk)

    # Rough per-step VMEM footprint (double-buffered inputs + acc + out);
    # only raise the scoped limit when the default would be too small.
    step_bytes = 4 * (2 * n * tk + 2 * tk * tn + 2 * n * tn + 6 * tn)
    vmem_limit = None
    if step_bytes > 24 * 1024 * 1024:
        vmem_limit = min(int(step_bytes * 2), 100 * 1024 * 1024)

    out_p = pl.pallas_call(
        denselayer_kernel,
        out_shape=jax.ShapeDtypeStruct((n, cp), x.dtype),
        grid_spec=pltpu.PrefetchScalarGridSpec(
            num_scalar_prefetch=0,
            grid=grid,                                            # (j: C_out, k: C_in)
            in_specs=[
                pl.BlockSpec((n, tk), lambda j, k: (0, k)),       # x   (N resident)
                pl.BlockSpec((tk, tn), lambda j, k: (k, j)),      # W^T
                pl.BlockSpec((1, tn), lambda j, k: (0, j)),       # bias
                pl.BlockSpec((1, tn), lambda j, k: (0, j)),       # gamma
                pl.BlockSpec((1, tn), lambda j, k: (0, j)),       # beta
            ],
            out_specs=pl.BlockSpec((n, tn), lambda j, k: (0, j)),
            scratch_shapes=[pltpu.VMEM((n, tn), jnp.float32)],
        ),
        compiler_params=pltpu.CompilerParams(
            dimension_semantics=("parallel", "arbitrary"),
            vmem_limit_bytes=vmem_limit,
        ),
        cost_estimate=pl.CostEstimate(
            flops=2 * n * cp * cp,
            transcendentals=cp,
            bytes_accessed=4 * (2 * n * cp + cp * cp + 3 * cp),
        ),
    )(x_p, wt_p, b2, g2, be2)

    return out_p[:, :c] if cp != c else out_p


if __name__ == "__main__":
    N, C = 8, 32   # batch, channel (small, consistent with denselayer(channel=32))

    key = jax.random.PRNGKey(0)
    kx, kw, kb, kg, kbe = jax.random.split(key, 5)

    x = jax.random.normal(kx, (N, C), dtype=jnp.float32)
    # Synthetic parameters with nn.Linear(C, C) + BatchNorm1d(C) shapes.
    w = jax.random.normal(kw, (C, C), dtype=jnp.float32) * (1.0 / jnp.sqrt(C))
    b = jax.random.normal(kb, (C,), dtype=jnp.float32) * 0.1
    gamma = 1.0 + 0.1 * jax.random.normal(kg, (C,), dtype=jnp.float32)
    beta = 0.1 * jax.random.normal(kbe, (C,), dtype=jnp.float32)

    out = denselayer_forward(x, w, b, gamma, beta)
    jax.block_until_ready(out)

    # Pure-JAX reference (same math: Linear -> ReLU -> BatchNorm1d train-mode).
    h_ref = jnp.maximum(x @ w.T + b, 0.0)
    mu = jnp.mean(h_ref, axis=0, keepdims=True)
    var = jnp.mean((h_ref - mu) ** 2, axis=0, keepdims=True)
    ref = gamma * (h_ref - mu) / jnp.sqrt(var + EPS) + beta
    assert out.shape == ref.shape, "shape mismatch vs reference"
    assert jnp.allclose(out, ref, atol=1e-4, rtol=1e-4), "mismatch vs reference"

    print("KERNEL_OK")
</pallas_src>

<mosaic_0001>
module attributes {stable_mosaic.version = 11 : i64} {
  func.func @denselayer_kernel(%arg0: i32, %arg1: i32, %arg2: memref<8x128xf32, #tpu.memory_space<vmem>>, %arg3: memref<128x128xf32, #tpu.memory_space<vmem>>, %arg4: memref<1x128xf32, #tpu.memory_space<vmem>>, %arg5: memref<1x128xf32, #tpu.memory_space<vmem>>, %arg6: memref<1x128xf32, #tpu.memory_space<vmem>>, %arg7: memref<8x128xf32, #tpu.memory_space<vmem>>, %arg8: memref<8x128xf32, #tpu.memory_space<vmem>>) attributes {dimension_semantics = [#tpu.dimension_semantics<parallel>, #tpu.dimension_semantics<arbitrary>], iteration_bounds = array<i64: 1, 1>, scalar_prefetch = 0 : i64, scratch_operands = 1 : i64, tpu.core_type = #tpu.core_type<tc>, window_params = [{transform_indices = @transform_0, window_bounds = array<i64: 8, 128>}, {transform_indices = @transform_1, window_bounds = array<i64: 128, 128>}, {transform_indices = @transform_2, window_bounds = array<i64: 1, 128>}, {transform_indices = @transform_3, window_bounds = array<i64: 1, 128>}, {transform_indices = @transform_4, window_bounds = array<i64: 1, 128>}, {transform_indices = @transform_5, window_bounds = array<i64: 8, 128>}]} {
    %c0_i32 = arith.constant 0 : i32
    %0 = arith.cmpi eq, %arg1, %c0_i32 : i32
    %1 = arith.extui %0 : i1 to i32
    %c0_i32_0 = arith.constant 0 : i32
    %2 = arith.cmpi ne, %1, %c0_i32_0 : i32
    scf.if %2 {
      %cst_10 = arith.constant 0.000000e+00 : f32
      %12 = vector.broadcast %cst_10 : f32 to vector<8x128xf32>
      %c0_11 = arith.constant 0 : index
      %c0_12 = arith.constant 0 : index
      %13 = vector.load %arg8[%c0_11, %c0_12] : memref<8x128xf32, #tpu.memory_space<vmem>>, vector<8x128xf32>
      tpu.vector_store %arg8[%c0_11, %c0_12], %12 {strides = array<i32>} : memref<8x128xf32, #tpu.memory_space<vmem>>, vector<8x128xf32>,
    } else {
    }
    %c0 = arith.constant 0 : index
    %c0_1 = arith.constant 0 : index
    %3 = vector.load %arg8[%c0, %c0_1] : memref<8x128xf32, #tpu.memory_space<vmem>>, vector<8x128xf32>
    %c0_2 = arith.constant 0 : index
    %c0_3 = arith.constant 0 : index
    %4 = vector.load %arg2[%c0_2, %c0_3] : memref<8x128xf32, #tpu.memory_space<vmem>>, vector<8x128xf32>
    %c0_4 = arith.constant 0 : index
    %c0_5 = arith.constant 0 : index
    %5 = vector.load %arg3[%c0_4, %c0_5] : memref<128x128xf32, #tpu.memory_space<vmem>>, vector<128x128xf32>
    %cst = arith.constant dense<0.000000e+00> : vector<8x128xf32>
    %6 = tpu.matmul %4, %5, %cst {dimension_numbers = #tpu.dot_dimension_numbers<[1], [0], [0], [1], [0, 0, 1, 1], [], []>} : vector<8x128xf32>, vector<128x128xf32>, vector<8x128xf32> -> vector<8x128xf32>
    %7 = arith.addf %3, %6 : vector<8x128xf32>
    %c0_6 = arith.constant 0 : index
    %c0_7 = arith.constant 0 : index
    %8 = vector.load %arg8[%c0_6, %c0_7] : memref<8x128xf32, #tpu.memory_space<vmem>>, vector<8x128xf32>
    tpu.vector_store %arg8[%c0_6, %c0_7], %7 {strides = array<i32>} : memref<8x128xf32, #tpu.memory_space<vmem>>, vector<8x128xf32>,
    %c0_i32_8 = arith.constant 0 : i32
    %9 = arith.cmpi eq, %arg1, %c0_i32_8 : i32
    %10 = arith.extui %9 : i1 to i32
    %c0_i32_9 = arith.constant 0 : i32
    %11 = arith.cmpi ne, %10, %c0_i32_9 : i32
    scf.if %11 {
      %c0_10 = arith.constant 0 : index
      %c0_11 = arith.constant 0 : index
      %12 = vector.load %arg8[%c0_10, %c0_11] : memref<8x128xf32, #tpu.memory_space<vmem>>, vector<8x128xf32>
      %c0_12 = arith.constant 0 : index
      %c0_13 = arith.constant 0 : index
      %13 = vector.load %arg4[%c0_12, %c0_13] : memref<1x128xf32, #tpu.memory_space<vmem>>, vector<1x128xf32>
      %14 = vector.broadcast %13 : vector<1x128xf32> to vector<8x128xf32>
      %15 = arith.addf %12, %14 : vector<8x128xf32>
      %cst_14 = arith.constant 0.000000e+00 : f32
      %16 = vector.broadcast %cst_14 : f32 to vector<8x128xf32>
      %17 = arith.maximumf %15, %16 : vector<8x128xf32>
      %cst_15 = arith.constant dense<0.000000e+00> : vector<128xf32>
      %18 = vector.multi_reduction <add>, %17, %cst_15 [0] : vector<8x128xf32> to vector<128xf32>
      %19 = vector.shape_cast %18 : vector<128xf32> to vector<1x128xf32>
      %20 = arith.mulf %17, %17 : vector<8x128xf32>
      %cst_16 = arith.constant dense<0.000000e+00> : vector<128xf32>
      %21 = vector.multi_reduction <add>, %20, %cst_16 [0] : vector<8x128xf32> to vector<128xf32>
      %22 = vector.shape_cast %21 : vector<128xf32> to vector<1x128xf32>
      %cst_17 = arith.constant 1.250000e-01 : f32
      %23 = vector.broadcast %cst_17 : f32 to vector<1x128xf32>
      %24 = arith.mulf %19, %23 : vector<1x128xf32>
      %cst_18 = arith.constant 1.250000e-01 : f32
      %25 = vector.broadcast %cst_18 : f32 to vector<1x128xf32>
      %26 = arith.mulf %22, %25 : vector<1x128xf32>
      %27 = arith.mulf %24, %24 : vector<1x128xf32>
      %28 = arith.subf %26, %27 : vector<1x128xf32>
      %cst_19 = arith.constant 0.000000e+00 : f32
      %29 = vector.broadcast %cst_19 : f32 to vector<1x128xf32>
      %30 = arith.maximumf %28, %29 : vector<1x128xf32>
      %cst_20 = arith.constant 9.99999974E-6 : f32
      %31 = vector.broadcast %cst_20 : f32 to vector<1x128xf32>
      %32 = arith.addf %30, %31 : vector<1x128xf32>
      %33 = math.rsqrt %32 : vector<1x128xf32>
      %c0_21 = arith.constant 0 : index
      %c0_22 = arith.constant 0 : index
      %34 = vector.load %arg5[%c0_21, %c0_22] : memref<1x128xf32, #tpu.memory_space<vmem>>, vector<1x128xf32>
      %35 = vector.broadcast %24 : vector<1x128xf32> to vector<8x128xf32>
      %36 = arith.subf %17, %35 : vector<8x128xf32>
      %37 = vector.broadcast %34 : vector<1x128xf32> to vector<8x128xf32>
      %38 = arith.mulf %37, %36 : vector<8x128xf32>
      %39 = vector.broadcast %33 : vector<1x128xf32> to vector<8x128xf32>
      %40 = arith.mulf %38, %39 : vector<8x128xf32>
      %c0_23 = arith.constant 0 : index
      %c0_24 = arith.constant 0 : index
      %41 = vector.load %arg6[%c0_23, %c0_24] : memref<1x128xf32, #tpu.memory_space<vmem>>, vector<1x128xf32>
      %42 = vector.broadcast %41 : vector<1x128xf32> to vector<8x128xf32>
      %43 = arith.addf %40, %42 : vector<8x128xf32>
      %c0_25 = arith.constant 0 : index
      %c0_26 = arith.constant 0 : index
      %44 = vector.load %arg7[%c0_25, %c0_26] : memref<8x128xf32, #tpu.memory_space<vmem>>, vector<8x128xf32>
      tpu.vector_store %arg7[%c0_25, %c0_26], %43 {strides = array<i32>} : memref<8x128xf32, #tpu.memory_space<vmem>>, vector<8x128xf32>,
    } else {
    }
    return
  }
  func.func @transform_0(%arg0: i32, %arg1: i32) -> (i32, i32) {
    %c0_i32 = arith.constant 0 : i32
    %c0_i32_0 = arith.constant 0 : i32
    return %c0_i32, %arg1 : i32, i32
  }
  func.func @transform_1(%arg0: i32, %arg1: i32) -> (i32, i32) {
    %c0_i32 = arith.constant 0 : i32
    return %arg1, %arg0 : i32, i32
  }
  func.func @transform_2(%arg0: i32, %arg1: i32) -> (i32, i32) {
    %c0_i32 = arith.constant 0 : i32
    %c0_i32_0 = arith.constant 0 : i32
    return %c0_i32, %arg0 : i32, i32
  }
  func.func @transform_3(%arg0: i32, %arg1: i32) -> (i32, i32) {
    %c0_i32 = arith.constant 0 : i32
    %c0_i32_0 = arith.constant 0 : i32
    return %c0_i32, %arg0 : i32, i32
  }
  func.func @transform_4(%arg0: i32, %arg1: i32) -> (i32, i32) {
    %c0_i32 = arith.constant 0 : i32
    %c0_i32_0 = arith.constant 0 : i32
    return %c0_i32, %arg0 : i32, i32
  }
  func.func @transform_5(%arg0: i32, %arg1: i32) -> (i32, i32) {
    %c0_i32 = arith.constant 0 : i32
    %c0_i32_0 = arith.constant 0 : i32
    return %c0_i32, %arg0 : i32, i32
  }
}

</mosaic_0001>

<llo_original>
// kernel: tpu_custom_call.1
$region0: #{tpu_custom_call.1}
  #allocation0 [shape = 'u32[]', space=smem, size = 0x4, offset = 0x4, fixed_abs, tag = 'smem constant byte address 0x4 - core index']
  #allocation1 [shape = 'u32[144,128]{1,0:T(1,128)}', space=vmem, size = 0x12000, scoped, tag = 'internal scratch']
  #allocation2 [shape = 'f32[8,128]{1,0:T(8,128)}', space=vmem, size = 0x1000, scoped, tag = 'scratch operand']
  %s0 = inlined_call_operand.hbm [shape: f32[8,128], index: 0, kind: input, shape index: {}]
  %s1 = inlined_call_operand.hbm [shape: f32[128,128], index: 1, kind: input, shape index: {}]
  %s2 = inlined_call_operand.vmem [shape: f32[1,128], index: 2, kind: input, shape index: {}]
  %s3 = inlined_call_operand.vmem [shape: f32[1,128], index: 3, kind: input, shape index: {}]
  %s4 = inlined_call_operand.vmem [shape: f32[1,128], index: 4, kind: input, shape index: {}]
  %s5 = inlined_call_operand.hbm [shape: f32[8,128], index: 5, kind: output, shape index: {}]
  %s6 = sld [smem:[#allocation0]]
  $region46: #{tpu_custom_call.1} parent=0
    _
  %s8 = ssub.s32 1, %s6
  %s9 = scalar_select 0, %s8, %s6
  $region1: #{tpu_custom_call.1} parent=0
    #allocation3 [shape = 'u8[4096]{0}', space=vmem, size = 0x1000, scoped, tag = 'input window, operand 0, single buffered']
    #allocation4 [shape = 's32[1]{0}', space=sflag, size = 0x4, scoped, tag = 'scoped memory for tpu_custom_call.1']
    #allocation5 [shape = 's32[1]{0}', space=sflag, size = 0x4, scoped, tag = 'scoped memory for tpu_custom_call.1']
    #allocation6 [shape = 'u8[65536]{0}', space=vmem, size = 0x10000, scoped, tag = 'input window, operand 1, single buffered']
    #allocation7 [shape = 's32[1]{0}', space=sflag, size = 0x4, scoped, tag = 'scoped memory for tpu_custom_call.1']
    #allocation8 [shape = 'u8[4096]{0}', space=vmem, size = 0x1000, scoped, tag = 'output window, operand 0, single buffered']
    %10 = vsyncpa [#allocation4], 0
    %11 = vsyncpa [#allocation7], 0
    %12 = vsyncpa [#allocation5], 0
    // Predicated region
    $region2: #{tpu_custom_call.1} parent=1 // pred_check
      _
    $region3: #{tpu_custom_call.1} parent=1 // pred_check_branch
      %14 = sbr.rel (0) target = $region5
    $region4: #{tpu_custom_call.1} parent=1 // pred_region
      %s16 = ssub.s32 128, 128
      %17 = vsyncadd [#allocation4], %s16
      %s19 = sshll.u32 [#allocation3], 4
      %s20 = int_to_ptr.vmem [resolvable:$true] %s19
      %22 = dma.hbm_to_vmem [thread:$0]  %s0, 128, %s20, [#allocation4]
    $region5: #{tpu_custom_call.1} parent=1 // pred_fallthru
      _
    // Predicated region
    $region6: #{tpu_custom_call.1} parent=1 // pred_check
      _
    $region7: #{tpu_custom_call.1} parent=1 // pred_check_branch
      %24 = sbr.rel (0) target = $region9
    $region8: #{tpu_custom_call.1} parent=1 // pred_region
      %s26 = ssub.s32 2048, 2048
      %27 = vsyncadd [#allocation7], %s26
      %s28 = sshll.u32 [#allocation6], 4
      %s29 = int_to_ptr.vmem [resolvable:$true] %s28
      %34 = dma.hbm_to_vmem [thread:$0]  %s1, 2048, %s29, [#allocation7], 128, 128, 8
    $region9: #{tpu_custom_call.1} parent=1 // pred_fallthru
      _
    // Predicated region
    $region10: #{tpu_custom_call.1} parent=1 // pred_check
      _
    $region11: #{tpu_custom_call.1} parent=1 // pred_check_branch
      %36 = sbr.rel (0) target = $region13
    $region12: #{tpu_custom_call.1} parent=1 // pred_region
      _
    $region13: #{tpu_custom_call.1} parent=1 // pred_fallthru
      _
    // Predicated region
    $region14: #{tpu_custom_call.1} parent=1 // pred_check
      _
    $region15: #{tpu_custom_call.1} parent=1 // pred_check_branch
      %38 = sbr.rel (0) target = $region17
    $region16: #{tpu_custom_call.1} parent=1 // pred_region
      _
    $region17: #{tpu_custom_call.1} parent=1 // pred_fallthru
      _
    // Predicated region
    $region18: #{tpu_custom_call.1} parent=1 // pred_check
      _
    $region19: #{tpu_custom_call.1} parent=1 // pred_check_branch
      %40 = sbr.rel (0) target = $region21
    $region20: #{tpu_custom_call.1} parent=1 // pred_region
      _
    $region21: #{tpu_custom_call.1} parent=1 // pred_fallthru
      _
    // Predicated region
    $region22: #{tpu_custom_call.1} parent=1 // pred_check
      _
    $region23: #{tpu_custom_call.1} parent=1 // pred_check_branch
      %42 = sbr.rel (0) target = $region25
    $region24: #{tpu_custom_call.1} parent=1 // pred_region
      %43 = dma.done [#allocation4], 128
    $region25: #{tpu_custom_call.1} parent=1 // pred_fallthru
      _
    // Predicated region
    $region26: #{tpu_custom_call.1} parent=1 // pred_check
      _
    $region27: #{tpu_custom_call.1} parent=1 // pred_check_branch
      %45 = sbr.rel (0) target = $region29
    $region28: #{tpu_custom_call.1} parent=1 // pred_region
      %46 = dma.done [#allocation7], 2048
    $region29: #{tpu_custom_call.1} parent=1 // pred_fallthru
      _
    %p47 = scmp.eq.s32.totalorder 0, 0
    // Predicated region
    $region30: #{tpu_custom_call.1} parent=1 // pred_check
      %p48 = pneg %p47
    $region31: #{tpu_custom_call.1} parent=1 // pred_check_branch
      %50 = sbr.rel (%p48) target = $region33
    $region32: #{tpu_custom_call.1} parent=1 // pred_region
      %51 = vst [vmem:[#allocation2] sm:$0xff] 0.0
    $region33: #{tpu_custom_call.1} parent=1 // pred_fallthru
      _
    %v52 = vld [vmem:[#allocation2] sm:$0xff]
    %v53 = vld [vmem:[#allocation3] sm:$0xff]
    %v54 = vld [vmem:[#allocation6] sm:$0xff]
    %v55 = vld [vmem:[#allocation6 + $0x8] sm:$0xff]
    %v56 = vld [vmem:[#allocation6 + $0x10] sm:$0xff]
    %v57 = vld [vmem:[#allocation6 + $0x18] sm:$0xff]
    %v58 = vld [vmem:[#allocation6 + $0x20] sm:$0xff]
    %v59 = vld [vmem:[#allocation6 + $0x28] sm:$0xff]
    %v60 = vld [vmem:[#allocation6 + $0x30] sm:$0xff]
    %v61 = vld [vmem:[#allocation6 + $0x38] sm:$0xff]
    %v62 = vld [vmem:[#allocation6 + $0x40] sm:$0xff]
    %v63 = vld [vmem:[#allocation6 + $0x48] sm:$0xff]
    %v64 = vld [vmem:[#allocation6 + $0x50] sm:$0xff]
    %v65 = vld [vmem:[#allocation6 + $0x58] sm:$0xff]
    %v66 = vld [vmem:[#allocation6 + $0x60] sm:$0xff]
    %v67 = vld [vmem:[#allocation6 + $0x68] sm:$0xff]
    %v68 = vld [vmem:[#allocation6 + $0x70] sm:$0xff]
    %v69 = vld [vmem:[#allocation6 + $0x78] sm:$0xff]
    %70 = vmatprep.subr.mxu0 0.0
    %71 = vmatpush1.msra.mxu0 %v69
    %72 = vmatprep.subr.mxu0 0.0
    %73 = vmatpush1.msra.mxu0 %v68
    %74 = vmatprep.subr.mxu0 0.0
    %75 = vmatpush1.msra.mxu0 %v67
    %76 = vmatprep.subr.mxu0 0.0
    %77 = vmatpush1.msra.mxu0 %v66
    %78 = vmatprep.subr.mxu0 0.0
    %79 = vmatpush1.msra.mxu0 %v65
    %80 = vmatprep.subr.mxu0 0.0
    %81 = vmatpush1.msra.mxu0 %v64
    %82 = vmatprep.subr.mxu0 0.0
    %83 = vmatpush1.msra.mxu0 %v63
    %84 = vmatprep.subr.mxu0 0.0
    %85 = vmatpush1.msra.mxu0 %v62
    %86 = vmatprep.subr.mxu0 0.0
    %87 = vmatpush1.msra.mxu0 %v61
    %88 = vmatprep.subr.mxu0 0.0
    %89 = vmatpush1.msra.mxu0 %v60
    %90 = vmatprep.subr.mxu0 0.0
    %91 = vmatpush1.msra.mxu0 %v59
    %92 = vmatprep.subr.mxu0 0.0
    %93 = vmatpush1.msra.mxu0 %v58
    %94 = vmatprep.subr.mxu0 0.0
    %95 = vmatpush1.msra.mxu0 %v57
    %96 = vmatprep.subr.mxu0 0.0
    %97 = vmatpush1.msra.mxu0 %v56
    %98 = vmatprep.subr.mxu0 0.0
    %99 = vmatpush1.msra.mxu0 %v55
    %100 = vmatprep.subr.mxu0 0.0
    %101 = vmatpush1.msra.mxu0 %v54
    %102 = vmatprep.subr.mxu0 0.0
    %103 = vmatpush2.msra.mxu0 0.0
    %104 = vmatprep.subr.mxu0 0.0
    %105 = vmatpush2.msra.mxu0 0.0
    %106 = vmatprep.subr.mxu0 0.0
    %107 = vmatpush2.msra.mxu0 0.0
    %108 = vmatprep.subr.mxu0 0.0
    %109 = vmatpush2.msra.mxu0 0.0
    %110 = vmatprep.subr.mxu0 0.0
    %111 = vmatpush2.msra.mxu0 0.0
    %112 = vmatprep.subr.mxu0 0.0
    %113 = vmatpush2.msra.mxu0 0.0
    %114 = vmatprep.subr.mxu0 0.0
    %115 = vmatpush2.msra.mxu0 0.0
    %116 = vmatprep.subr.mxu0 0.0
    %117 = vmatpush2.msra.mxu0 0.0
    %118 = vmatprep.subr.mxu0 0.0
    %119 = vmatpush2.msra.mxu0 0.0
    %120 = vmatprep.subr.mxu0 0.0
    %121 = vmatpush2.msra.mxu0 0.0
    %122 = vmatprep.subr.mxu0 0.0
    %123 = vmatpush2.msra.mxu0 0.0
    %124 = vmatprep.subr.mxu0 0.0
    %125 = vmatpush2.msra.mxu0 0.0
    %126 = vmatprep.subr.mxu0 0.0
    %127 = vmatpush2.msra.mxu0 0.0
    %128 = vmatprep.subr.mxu0 0.0
    %129 = vmatpush2.msra.mxu0 0.0
    %130 = vmatprep.subr.mxu0 0.0
    %131 = vmatpush2.msra.mxu0 0.0
    %132 = vmatprep.subr.mxu0 0.0
    %133 = vmatpush2.msra.mxu0 0.0
    %134 = vmatprep.mubr.f32.mxu0 0.0
    %135 = vmatmul.mubr.f32.gmra.mxu0 %v53
    %v136 = vpop.f32.mrf.mxu0
    %v137 = vadd.f32 0.0, %v136
    %v138 = vpop.f32.mrf.mxu0
    %139 = vdwg.mxu0
    %v140 = vadd.f32 %v52, %v137
    %141 = vst [vmem:[#allocation2] sm:$0xff] %v140
    // Predicated region
    $region34: #{tpu_custom_call.1} parent=1 // pred_check
      %p142 = pneg %p47
    $region35: #{tpu_custom_call.1} parent=1 // pred_check_branch
      %144 = sbr.rel (%p142) target = $region37
    $region36: #{tpu_custom_call.1} parent=1 // pred_region
      %v145 = vld [vmem:[#allocation2] sm:$0xff]
      %v146 = vld [vmem:[%s2] sm:$0x1]
      %v148 = vlaneseq
      %v149 = vshrl.u32 %v148, 7
      %v150 = vsub.s32 0, %v149
      %v151 = vrot.slane %v146, %v150
      %v153 = vadd.f32 %v145, %v151
      %v154 = vmax.f32 %v153, 0.0
      %v155 = vrot.slane %v154, 4
      %v156 = vadd.f32 %v154, %v155
      %v157 = vrot.slane %v156, 2
      %v158 = vadd.f32 %v156, %v157
      %v159 = vrot.slane %v158, 1
      %v160 = vadd.f32 %v158, %v159
      %v161 = vmul.f32 %v154, %v154
      %v162 = vrot.slane %v161, 4
      %v163 = vadd.f32 %v161, %v162
      %v164 = vrot.slane %v163, 2
      %v165 = vadd.f32 %v163, %v164
      %v166 = vrot.slane %v165, 1
      %v167 = vadd.f32 %v165, %v166
      %v168 = vmul.f32 %v160, 0.125
      %v169 = vmul.f32 %v167, 0.125
      %v170 = vmul.f32 %v168, %v168
      %v171 = vsub.f32 %v169, %v170
      %v172 = vmax.f32 %v171, 0.0
      %v173 = vadd.f32 %v172, 1e-05
      %v174 = vrsqrt.pop %v173
      %v175 = vld [vmem:[%s3] sm:$0x1]
      %v176 = vsub.f32 %v154, %v168
      %v178 = vlaneseq
      %v179 = vshrl.u32 %v178, 7
      %v180 = vsub.s32 0, %v179
      %v181 = vrot.slane %v175, %v180
      %v183 = vmul.f32 %v181, %v176
      %v184 = vmul.f32 %v183, %v174
      %v185 = vld [vmem:[%s4] sm:$0x1]
      %v187 = vlaneseq
      %v188 = vshrl.u32 %v187, 7
      %v189 = vsub.s32 0, %v188
      %v190 = vrot.slane %v185, %v189
      %v192 = vadd.f32 %v184, %v190
      %193 = vst [vmem:[#allocation8] sm:$0xff] %v192
    $region37: #{tpu_custom_call.1} parent=1 // pred_fallthru
      _
    // Predicated region
    $region38: #{tpu_custom_call.1} parent=1 // pred_check
      _
    $region39: #{tpu_custom_call.1} parent=1 // pred_check_branch
      %195 = sbr.rel (0) target = $region41
    $region40: #{tpu_custom_call.1} parent=1 // pred_region
      %s197 = ssub.s32 128, 128
      %198 = vsyncadd [#allocation5], %s197
      %s200 = sshll.u32 [#allocation8], 4
      %s201 = int_to_ptr.vmem [resolvable:$true] %s200
      %203 = dma.vmem_to_hbm [thread:$0]  %s201, 128, %s5, [#allocation5]
    $region41: #{tpu_custom_call.1} parent=1 // pred_fallthru
      _
    // Predicated region
    $region42: #{tpu_custom_call.1} parent=1 // pred_check
      _
    $region43: #{tpu_custom_call.1} parent=1 // pred_check_branch
      %205 = sbr.rel (0) target = $region45
    $region44: #{tpu_custom_call.1} parent=1 // pred_region
      %206 = dma.done [#allocation5], 128
    $region45: #{tpu_custom_call.1} parent=1 // pred_fallthru
      _
    %207 = vsyncpa [#allocation4], 1
    %208 = vsyncpa [#allocation7], 1
    %209 = vsyncpa [#allocation5], 1

</llo_original>
